<compile_context>
chip_gen: v5e
topology: v5e:2x2
jax: 0.10.0
libtpu: 0.0.40
codegen_flags: <defaults>
</compile_context>

<pallas_src>
import functools

import jax
import jax.numpy as jnp
from jax.experimental import pallas as pl
from jax.experimental.pallas import tpu as pltpu


def _round_up(x, m):
    return (x + m - 1) // m * m


def smoothnet_loss_ref(denoise, gt, w_accel, w_pos):
    """Pure-JAX reference mirroring the PyTorch forward (also the fallback path)."""
    d = jnp.transpose(denoise, (0, 2, 1)).astype(jnp.float32)  # (B, C, L)
    g = jnp.transpose(gt, (0, 2, 1)).astype(jnp.float32)
    loss_pos = jnp.mean(jnp.abs(d - g))
    accel_g = g[:, :, :-2] - 2.0 * g[:, :, 1:-1] + g[:, :, 2:]
    accel_d = d[:, :, :-2] - 2.0 * d[:, :, 1:-1] + d[:, :, 2:]
    loss_accel = jnp.mean(jnp.abs(accel_d - accel_g))
    return (w_accel * loss_accel + w_pos * loss_pos).astype(jnp.float32)


def _smoothnet_kernel(d_ref, g_ref, out_ref):
    # d_ref/g_ref: (TB, L, C) block in native layout (time -> sublanes,
    # channels -> lanes).  out_ref: (1, 2, C) per-step partial sums.
    d = d_ref[...].astype(jnp.float32)
    g = g_ref[...].astype(jnp.float32)
    e = d - g                                    # residual reused by both terms

    # Position term: |d - g| summed over (batch tile, time), kept per channel lane.
    out_ref[:, 0:1, :] = jnp.sum(jnp.abs(e), axis=(0, 1), keepdims=True)

    # Acceleration term: second difference of the residual along time
    # (accel is linear, so accel(d) - accel(g) == accel(e)).  Static slices on
    # the sublane axis; L is unpadded (block extents == full array extents).
    r = e[:, :-2, :] - 2.0 * e[:, 1:-1, :] + e[:, 2:, :]
    out_ref[:, 1:2, :] = jnp.sum(jnp.abs(r), axis=(0, 1), keepdims=True)


def smoothnet_loss_pallas(denoise, gt, *, w_accel, w_pos,
                          block_bytes=2 * 1024 * 1024,
                          vmem_limit_bytes=32 * 1024 * 1024,
                          min_pallas_bytes=2 * 1024 * 1024):
    """Weighted SmoothNet loss (scalar f32).  denoise/gt: (B, L, C)."""
    B, L, C = denoise.shape
    if gt.shape != denoise.shape:
        raise ValueError("denoise and gt must have the same shape")
    if L < 3:
        raise ValueError("SmoothNetLoss requires L >= 3 for the accel term")

    itemsize = jnp.dtype(denoise.dtype).itemsize

    # Small-problem gate: below ~min_pallas_bytes the fused XLA reduction beats
    # the pallas_call fixed overhead on every generation.
    if 2 * B * L * C * itemsize < min_pallas_bytes:
        return smoothnet_loss_ref(denoise, gt, w_accel, w_pos)

    # VMEM footprint of one batch element's (L, C) tile (sublane/lane padded;
    # bf16 packs 16 rows per sublane group, int8 32).
    sub = {4: 8, 2: 16, 1: 32}.get(itemsize, 8)
    vmem_per_batch = _round_up(L, sub) * _round_up(C, 128) * itemsize

    # Long-sequence guard: even a single-example block (2 inputs x 2 pipeline
    # buffers + f32 working set) must fit the scoped-VMEM budget (v7x: 64 MiB
    # physical is the first ceiling to break).
    # TODO(synk): tile the time axis with a 2-row halo for extremely long L
    # instead of falling back to the fused XLA reduction.
    f32_work = 3 * _round_up(L, 8) * _round_up(C, 128) * 4
    if 4 * vmem_per_batch + f32_work > vmem_limit_bytes:
        return smoothnet_loss_ref(denoise, gt, w_accel, w_pos)

    # Batch-tile size: largest divisor of B whose block fits `block_bytes`
    # (amortizes the ~0.35 us per-step overhead), capped at B//2 so the grid
    # has >= 2 "parallel" steps and both v7x TensorCores stay busy.  On v6e
    # (128 MiB VMEM) block_bytes can be raised to 8-16 MiB for a few % more.
    max_tb = max(1, int(block_bytes) // vmem_per_batch)
    if B >= 2:
        max_tb = min(max_tb, B // 2)
    max_tb = max(1, min(max_tb, B))
    tb = 1
    for cand in range(1, max_tb + 1):
        if B % cand == 0:
            tb = cand
    G = B // tb

    partials = pl.pallas_call(
        _smoothnet_kernel,
        out_shape=jax.ShapeDtypeStruct((G, 2, C), jnp.float32),
        grid=(G,),
        in_specs=[pl.BlockSpec((tb, L, C), lambda j: (j, 0, 0)),
                  pl.BlockSpec((tb, L, C), lambda j: (j, 0, 0))],
        out_specs=pl.BlockSpec((1, 2, C), lambda j: (j, 0, 0)),
        compiler_params=pltpu.CompilerParams(
            dimension_semantics=("parallel",),
            vmem_limit_bytes=vmem_limit_bytes),
    )(denoise, gt)

    # Tiny final reduction / combine in the wrapper (keeps the grid stateless).
    pos_sum = jnp.sum(partials[:, 0, :])
    acc_sum = jnp.sum(partials[:, 1, :])
    loss_pos = pos_sum / float(B * L * C)
    loss_accel = acc_sum / float(B * (L - 2) * C)
    return (w_accel * loss_accel + w_pos * loss_pos).astype(jnp.float32)


if __name__ == "__main__":
    # Module "parameters" are just the two loss weights (deterministic).
    w_accel = 1.0
    w_pos = 0.5

    key = jax.random.PRNGKey(0)
    k1, k2, k3, k4 = jax.random.split(key, 4)

    loss_fn = jax.jit(functools.partial(
        smoothnet_loss_pallas, w_accel=w_accel, w_pos=w_pos,
        min_pallas_bytes=0))  # force the Pallas path for this smoke test

    # Case 1: lane-friendly small shape.
    B, L, C = 4, 32, 32
    d1 = jax.random.normal(k1, (B, L, C), dtype=jnp.float32)
    g1 = jax.random.normal(k2, (B, L, C), dtype=jnp.float32)
    out1 = loss_fn(d1, g1)
    jax.block_until_ready(out1)
    ref1 = smoothnet_loss_ref(d1, g1, w_accel, w_pos)
    assert jnp.allclose(out1, ref1, rtol=1e-5, atol=1e-5), (out1, ref1)

    # Case 2: awkward shapes (L not a multiple of 8, C not a multiple of 128,
    # odd B) to exercise the full-extent block path and the divisor tiling.
    B2, L2, C2 = 3, 19, 17
    d2 = jax.random.normal(k3, (B2, L2, C2), dtype=jnp.float32)
    g2 = jax.random.normal(k4, (B2, L2, C2), dtype=jnp.float32)
    out2 = loss_fn(d2, g2)
    jax.block_until_ready(out2)
    ref2 = smoothnet_loss_ref(d2, g2, w_accel, w_pos)
    assert jnp.allclose(out2, ref2, rtol=1e-5, atol=1e-5), (out2, ref2)

    print("KERNEL_OK")
</pallas_src>

<mosaic_0001>
module attributes {stable_mosaic.version = 11 : i64} {
  func.func @_smoothnet_kernel(%arg0: i32, %arg1: memref<2x32x32xf32, #tpu.memory_space<vmem>>, %arg2: memref<2x32x32xf32, #tpu.memory_space<vmem>>, %arg3: memref<1x2x32xf32, #tpu.memory_space<vmem>>) attributes {dimension_semantics = [#tpu.dimension_semantics<parallel>], iteration_bounds = array<i64: 2>, scalar_prefetch = 0 : i64, scratch_operands = 0 : i64, tpu.core_type = #tpu.core_type<tc>, window_params = [{transform_indices = @transform_0, window_bounds = array<i64: 2, 32, 32>}, {transform_indices = @transform_1, window_bounds = array<i64: 2, 32, 32>}, {transform_indices = @transform_2, window_bounds = array<i64: 1, 2, 32>}]} {
    %c0 = arith.constant 0 : index
    %c0_0 = arith.constant 0 : index
    %c0_1 = arith.constant 0 : index
    %0 = vector.load %arg1[%c0, %c0_0, %c0_1] : memref<2x32x32xf32, #tpu.memory_space<vmem>>, vector<2x32x32xf32>
    %c0_2 = arith.constant 0 : index
    %c0_3 = arith.constant 0 : index
    %c0_4 = arith.constant 0 : index
    %1 = vector.load %arg2[%c0_2, %c0_3, %c0_4] : memref<2x32x32xf32, #tpu.memory_space<vmem>>, vector<2x32x32xf32>
    %2 = arith.subf %0, %1 : vector<2x32x32xf32>
    %3 = math.absf %2 : vector<2x32x32xf32>
    %cst = arith.constant dense<0.000000e+00> : vector<32xf32>
    %4 = vector.multi_reduction <add>, %3, %cst [0, 1] : vector<2x32x32xf32> to vector<32xf32>
    %5 = vector.shape_cast %4 : vector<32xf32> to vector<1x1x32xf32>
    %c0_5 = arith.constant 0 : index
    %c0_6 = arith.constant 0 : index
    %c0_7 = arith.constant 0 : index
    %6 = vector.load %arg3[%c0_5, %c0_6, %c0_7] : memref<1x2x32xf32, #tpu.memory_space<vmem>>, vector<1x1x32xf32>
    tpu.vector_store %arg3[%c0_5, %c0_6, %c0_7], %5 {strides = array<i32>} : memref<1x2x32xf32, #tpu.memory_space<vmem>>, vector<1x1x32xf32>,
    %7 = vector.extract_strided_slice %2 {offsets = [0, 0, 0], sizes = [2, 30, 32], strides = [1, 1, 1]} : vector<2x32x32xf32> to vector<2x30x32xf32>
    %8 = vector.extract_strided_slice %2 {offsets = [0, 1, 0], sizes = [2, 30, 32], strides = [1, 1, 1]} : vector<2x32x32xf32> to vector<2x30x32xf32>
    %cst_8 = arith.constant 2.000000e+00 : f32
    %9 = vector.broadcast %cst_8 : f32 to vector<2x30x32xf32>
    %10 = arith.mulf %9, %8 : vector<2x30x32xf32>
    %11 = arith.subf %7, %10 : vector<2x30x32xf32>
    %12 = vector.extract_strided_slice %2 {offsets = [0, 2, 0], sizes = [2, 30, 32], strides = [1, 1, 1]} : vector<2x32x32xf32> to vector<2x30x32xf32>
    %13 = arith.addf %11, %12 : vector<2x30x32xf32>
    %14 = math.absf %13 : vector<2x30x32xf32>
    %cst_9 = arith.constant dense<0.000000e+00> : vector<32xf32>
    %15 = vector.multi_reduction <add>, %14, %cst_9 [0, 1] : vector<2x30x32xf32> to vector<32xf32>
    %16 = vector.shape_cast %15 : vector<32xf32> to vector<1x1x32xf32>
    %c0_10 = arith.constant 0 : index
    %c1 = arith.constant 1 : index
    %c0_11 = arith.constant 0 : index
    %17 = vector.load %arg3[%c0_10, %c1, %c0_11] : memref<1x2x32xf32, #tpu.memory_space<vmem>>, vector<1x1x32xf32>
    tpu.vector_store %arg3[%c0_10, %c1, %c0_11], %16 {strides = array<i32>} : memref<1x2x32xf32, #tpu.memory_space<vmem>>, vector<1x1x32xf32>,
    return
  }
  func.func @transform_0(%arg0: i32) -> (i32, i32, i32) {
    %c0_i32 = arith.constant 0 : i32
    %c0_i32_0 = arith.constant 0 : i32
    %c0_i32_1 = arith.constant 0 : i32
    return %arg0, %c0_i32, %c0_i32_0 : i32, i32, i32
  }
  func.func @transform_1(%arg0: i32) -> (i32, i32, i32) {
    %c0_i32 = arith.constant 0 : i32
    %c0_i32_0 = arith.constant 0 : i32
    %c0_i32_1 = arith.constant 0 : i32
    return %arg0, %c0_i32, %c0_i32_0 : i32, i32, i32
  }
  func.func @transform_2(%arg0: i32) -> (i32, i32, i32) {
    %c0_i32 = arith.constant 0 : i32
    %c0_i32_0 = arith.constant 0 : i32
    %c0_i32_1 = arith.constant 0 : i32
    return %arg0, %c0_i32, %c0_i32_0 : i32, i32, i32
  }
}

</mosaic_0001>

<llo_original>
// kernel: smoothnet_loss_pallas.1
$region0: #{smoothnet_loss_pallas.1}
  #allocation0 [shape = 'u32[]', space=smem, size = 0x4, offset = 0x4, fixed_abs, tag = 'smem constant byte address 0x4 - core index']
  #allocation1 [shape = 'u32[72,128]{1,0:T(1,128)}', space=vmem, size = 0x9000, scoped, tag = 'internal scratch']
  %s0 = inlined_call_operand.hbm [shape: f32[4,32,32], index: 0, kind: input, shape index: {}]
  %s1 = inlined_call_operand.hbm [shape: f32[4,32,32], index: 1, kind: input, shape index: {}]
  %s2 = inlined_call_operand.vmem [shape: f32[2,2,32], index: 2, kind: output, shape index: {}]
  %s3 = sld [smem:[#allocation0]]
  $region49: #{smoothnet_loss_pallas.1} parent=0
    _
  %s5 = ssub.s32 1, %s3
  %s6 = scalar_select 0, %s5, %s3
  $region1: #{smoothnet_loss_pallas.1} parent=0
    #allocation2 [shape = 'u8[65536]{0}', space=vmem, size = 0x10000, scoped, tag = 'input window, operand 0']
    #allocation3 [shape = 's32[2]{0}', space=sflag, size = 0x8, scoped, tag = 'scoped memory for smoothnet_loss_pallas.1']
    #allocation4 [shape = 'u8[65536]{0}', space=vmem, size = 0x10000, scoped, tag = 'input window, operand 1']
    #allocation5 [shape = 's32[2]{0}', space=sflag, size = 0x8, scoped, tag = 'scoped memory for smoothnet_loss_pallas.1']
    %7 = vsyncpa [#allocation3], 0
    %s8 = scalar_lea.sflag [#allocation3], 1
    %9 = vsyncpa %s8, 0
    %10 = vsyncpa [#allocation5], 0
    %s11 = scalar_lea.sflag [#allocation5], 1
    %12 = vsyncpa %s11, 0
    loop: start=0, step=1, limit=4
    $region2: #{smoothnet_loss_pallas.1} parent=1 // loop_pre_header
      _
    $region3: #{smoothnet_loss_pallas.1} parent=1 // loop_header
      %s14 = sphi 0, %s18
      %p15 = scmp.ge.s32.totalorder %s14, 4
      %s24 = sphi 0, %s26
      %s27 = sphi 0, %s24
      %s28 = sphi 0, %s27
      %s44 = sphi 0, %s28
      %s50 = sphi 0, %s52
      %s53 = sphi 0, %s50
      %s54 = sphi 0, %s53
      %s70 = sphi 0, %s54
      %s76 = sphi 0, %s78
      %s79 = sphi 0, %s76
      %s80 = sphi 0, %s79
      %s96 = sphi 0, %s80
    $region4: #{smoothnet_loss_pallas.1} parent=1 // loop_header_branch
      %17 = sbr.rel (%p15) target = $region8
    $region5: #{smoothnet_loss_pallas.1} parent=1 // loop_body
      %s19 = ssub.s32 %s14, 1
      %s20 = ssub.s32 %s14, 2
      %s21 = sadd.s32 %s14, 1
      %s22 = ssub.s32 %s14, %s21
      %p23 = scmp.eq.s32.totalorder %s22, 0
      %s25 = sadd.s32 %s24, 1
      %s26 = scalar_select %p23, %s24, %s25
      %p29 = pneg %p23
      %p30 = scmp.eq.s32.totalorder %s14, 1
      %p31 = por %p29, %p30
      %p32 = scmp.ne.s32.totalorder %s24, %s27
      %p33 = scmp.eq.s32.totalorder %s14, 0
      %p34 = por %p32, %p33
      %p35 = scmp.ne.s32.totalorder %s24, %s27
      %p36 = scmp.eq.s32.totalorder %s19, 1
      %p37 = por %p35, %p36
      %p38 = scmp.ne.s32.totalorder %s27, %s28
      %p39 = scmp.eq.s32.totalorder %s19, 0
      %p40 = por %p38, %p39
      %p41 = scmp.ne.s32.totalorder %s27, %s28
      %p42 = scmp.eq.s32.totalorder %s20, 1
      %p43 = por %p41, %p42
      %p45 = scmp.ne.s32.totalorder %s28, %s44
      %p46 = scmp.eq.s32.totalorder %s20, 0
      %p47 = por %p45, %p46
      %s48 = ssub.s32 %s14, %s21
      %p49 = scmp.eq.s32.totalorder %s48, 0
      %s51 = sadd.s32 %s50, 1
      %s52 = scalar_select %p49, %s50, %s51
      %p55 = pneg %p49
      %p56 = scmp.eq.s32.totalorder %s14, 1
      %p57 = por %p55, %p56
      %p58 = scmp.ne.s32.totalorder %s50, %s53
      %p59 = scmp.eq.s32.totalorder %s14, 0
      %p60 = por %p58, %p59
      %p61 = scmp.ne.s32.totalorder %s50, %s53
      %p62 = scmp.eq.s32.totalorder %s19, 1
      %p63 = por %p61, %p62
      %p64 = scmp.ne.s32.totalorder %s53, %s54
      %p65 = scmp.eq.s32.totalorder %s19, 0
      %p66 = por %p64, %p65
      %p67 = scmp.ne.s32.totalorder %s53, %s54
      %p68 = scmp.eq.s32.totalorder %s20, 1
      %p69 = por %p67, %p68
      %p71 = scmp.ne.s32.totalorder %s54, %s70
      %p72 = scmp.eq.s32.totalorder %s20, 0
      %p73 = por %p71, %p72
      %s74 = ssub.s32 %s14, %s21
      %p75 = scmp.eq.s32.totalorder %s74, 0
      %s77 = sadd.s32 %s76, 1
      %s78 = scalar_select %p75, %s76, %s77
      %p81 = pneg %p75
      %p82 = scmp.eq.s32.totalorder %s14, 1
      %p83 = por %p81, %p82
      %p84 = scmp.ne.s32.totalorder %s76, %s79
      %p85 = scmp.eq.s32.totalorder %s14, 0
      %p86 = por %p84, %p85
      %p87 = scmp.ne.s32.totalorder %s76, %s79
      %p88 = scmp.eq.s32.totalorder %s19, 1
      %p89 = por %p87, %p88
      %p90 = scmp.ne.s32.totalorder %s79, %s80
      %p91 = scmp.eq.s32.totalorder %s19, 0
      %p92 = por %p90, %p91
      %p93 = scmp.ne.s32.totalorder %s79, %s80
      %p94 = scmp.eq.s32.totalorder %s20, 1
      %p95 = por %p93, %p94
      %p97 = scmp.ne.s32.totalorder %s80, %s96
      %p98 = scmp.eq.s32.totalorder %s20, 0
      %p99 = por %p97, %p98
      %p100 = scmp.le.s32.totalorder 1, %s14
      %p101 = scmp.lt.s32.totalorder %s14, 3
      %p102 = pnand %p100, %p101
      %p103 = pneg %p102
      // Predicated region
      $region9: #{smoothnet_loss_pallas.1} parent=5 // pred_check
        _
      $region10: #{smoothnet_loss_pallas.1} parent=5 // pred_check_branch
        %105 = sbr.rel (%p102) target = $region12
      $region11: #{smoothnet_loss_pallas.1} parent=5 // pred_region
        %s106 = ssub.s32 %s14, 1
      $region12: #{smoothnet_loss_pallas.1} parent=5 // pred_fallthru
        _
      %p107 = scmp.lt.s32.totalorder %s14, 2
      // Predicated region
      $region13: #{smoothnet_loss_pallas.1} parent=5 // pred_check
        %p108 = pneg %p107
      $region14: #{smoothnet_loss_pallas.1} parent=5 // pred_check_branch
        %110 = sbr.rel (%p108) target = $region16
      $region15: #{smoothnet_loss_pallas.1} parent=5 // pred_region
        // Predicated region
        $region17: #{smoothnet_loss_pallas.1} parent=15 // pred_check
          %p111 = pneg %p34
        $region18: #{smoothnet_loss_pallas.1} parent=15 // pred_check_branch
          %113 = sbr.rel (%p111) target = $region20
        $region19: #{smoothnet_loss_pallas.1} parent=15 // pred_region
          %s114 = sand.u32 %s24, 1
          %s115 = scalar_lea.sflag [#allocation3], %s114
          %s116 = sand.u32 %s24, 1
          %s117 = smul.addr %s116, 64
          %s118 = scalar_lea.vmem [#allocation2], %s117
          %s119 = smul.u32 2, %s14
          %121 = vsyncadd %s115, 0
          %s122 = smul.addr %s119, 4
          %s123 = smul.addr %s122, 8
          %s124 = scalar_lea.hbm %s0, %s123
          %s125 = sshll.u32 %s124, 4
          %s126 = int_to_ptr.hbm [resolvable:$true] %s125
          %s127 = sshll.u32 %s118, 4
          %s128 = int_to_ptr.vmem [resolvable:$true] %s127
          %133 = dma.hbm_to_vmem [thread:$0]  %s126, 1024, %s128, %s115, 128, 128, 8
        $region20: #{smoothnet_loss_pallas.1} parent=15 // pred_fallthru
          _
        // Predicated region
        $region21: #{smoothnet_loss_pallas.1} parent=15 // pred_check
          %p134 = pneg %p60
        $region22: #{smoothnet_loss_pallas.1} parent=15 // pred_check_branch
          %136 = sbr.rel (%p134) target = $region24
        $region23: #{smoothnet_loss_pallas.1} parent=15 // pred_region
          %s137 = sand.u32 %s50, 1
          %s138 = scalar_lea.sflag [#allocation5], %s137
          %s139 = sand.u32 %s50, 1
          %s140 = smul.addr %s139, 64
          %s141 = scalar_lea.vmem [#allocation4], %s140
          %s142 = smul.u32 2, %s14
          %144 = vsyncadd %s138, 0
          %s145 = smul.addr %s142, 4
          %s146 = smul.addr %s145, 8
          %s147 = scalar_lea.hbm %s1, %s146
          %s148 = sshll.u32 %s147, 4
          %s149 = int_to_ptr.hbm [resolvable:$true] %s148
          %s150 = sshll.u32 %s141, 4
          %s151 = int_to_ptr.vmem [resolvable:$true] %s150
          %156 = dma.hbm_to_vmem [thread:$0]  %s149, 1024, %s151, %s138, 128, 128, 8
        $region24: #{smoothnet_loss_pallas.1} parent=15 // pred_fallthru
          _
      $region16: #{smoothnet_loss_pallas.1} parent=5 // pred_fallthru
        _
      %p157 = scmp.le.s32.totalorder 1, %s14
      %p158 = scmp.lt.s32.totalorder %s14, 3
      %p159 = pnand %p157, %p158
      %p160 = pneg %p159
      // Predicated region
      $region25: #{smoothnet_loss_pallas.1} parent=5 // pred_check
        _
      $region26: #{smoothnet_loss_pallas.1} parent=5 // pred_check_branch
        %162 = sbr.rel (%p159) target = $region28
      $region27: #{smoothnet_loss_pallas.1} parent=5 // pred_region
        %s163 = ssub.s32 %s14, 1
        %s164 = sand.u32 %s27, 1
        %s165 = scalar_lea.sflag [#allocation3], %s164
        %s166 = sand.u32 %s27, 1
        %s167 = smul.addr %s166, 64
        %s168 = scalar_lea.vmem [#allocation2], %s167
        // Predicated region
        $region29: #{smoothnet_loss_pallas.1} parent=27 // pred_check
          %p169 = pneg %p40
        $region30: #{smoothnet_loss_pallas.1} parent=27 // pred_check_branch
          %171 = sbr.rel (%p169) target = $region32
        $region31: #{smoothnet_loss_pallas.1} parent=27 // pred_region
          %173 = dma.done %s165, 1024
        $region32: #{smoothnet_loss_pallas.1} parent=27 // pred_fallthru
          _
        %s174 = sand.u32 %s53, 1
        %s175 = scalar_lea.sflag [#allocation5], %s174
        %s176 = sand.u32 %s53, 1
        %s177 = smul.addr %s176, 64
        %s178 = scalar_lea.vmem [#allocation4], %s177
        // Predicated region
        $region33: #{smoothnet_loss_pallas.1} parent=27 // pred_check
          %p179 = pneg %p66
        $region34: #{smoothnet_loss_pallas.1} parent=27 // pred_check_branch
          %181 = sbr.rel (%p179) target = $region36
        $region35: #{smoothnet_loss_pallas.1} parent=27 // pred_region
          %183 = dma.done %s175, 1024
        $region36: #{smoothnet_loss_pallas.1} parent=27 // pred_fallthru
          _
        %s184 = sand.u32 %s27, 1
        %s185 = scalar_lea.sflag [#allocation3], %s184
        %s186 = sand.u32 %s27, 1
        %s187 = smul.addr %s186, 64
        %s188 = scalar_lea.vmem [#allocation2], %s187
        %p189 = pneg %p40
        %p190 = pneg %p37
        %s191 = sand.u32 %s53, 1
        %s192 = scalar_lea.sflag [#allocation5], %s191
        %s193 = sand.u32 %s53, 1
        %s194 = smul.addr %s193, 64
        %s195 = scalar_lea.vmem [#allocation4], %s194
        %p196 = pneg %p66
        %p197 = pneg %p63
        %p198 = pneg %p92
        %p199 = pneg %p89
        %p200 = scmp.lt.s32.totalorder %s19, 1
        %s201 = scalar_select %p200, %s19, 1
        %s202 = smul.addr %s201, 2
        %s203 = scalar_lea.vmem %s2, %s202
        %s204 = smul.u32 2, %s19
        %s205 = smul.u32 2, %s19
        %p206 = scmp.lt.s32.totalorder %s19, 1
        %s207 = scalar_select %p206, %s19, 1
        %s208 = smul.addr %s207, 2
        %s209 = scalar_lea.vmem %s2, %s208
        %v210 = vld [vmem:[%s168] sm:$0xff]
        %v211 = vld [vmem:[%s168 + $0x8] sm:$0xff]
        %v212 = vld [vmem:[%s168 + $0x10] sm:$0xff]
        %v213 = vld [vmem:[%s168 + $0x18] sm:$0xff]
        %v214 = vld [vmem:[%s168 + $0x20] sm:$0xff]
        %v215 = vld [vmem:[%s168 + $0x28] sm:$0xff]
        %v216 = vld [vmem:[%s168 + $0x30] sm:$0xff]
        %v217 = vld [vmem:[%s168 + $0x38] sm:$0xff]
        %v218 = vld [vmem:[%s178] sm:$0xff]
        %v219 = vld [vmem:[%s178 + $0x8] sm:$0xff]
        %v220 = vld [vmem:[%s178 + $0x10] sm:$0xff]
        %v221 = vld [vmem:[%s178 + $0x18] sm:$0xff]
        %v222 = vld [vmem:[%s178 + $0x20] sm:$0xff]
        %v223 = vld [vmem:[%s178 + $0x28] sm:$0xff]
        %v224 = vld [vmem:[%s178 + $0x30] sm:$0xff]
        %v225 = vld [vmem:[%s178 + $0x38] sm:$0xff]
        %v226 = vsub.f32 %v210, %v218
        %v227 = vsub.f32 %v211, %v219
        %v228 = vsub.f32 %v212, %v220
        %v229 = vsub.f32 %v213, %v221
        %v230 = vsub.f32 %v214, %v222
        %v231 = vsub.f32 %v215, %v223
        %v232 = vsub.f32 %v216, %v224
        %v233 = vsub.f32 %v217, %v225
        %v234 = vand.u32 2147483647, %v226
        %v235 = vand.u32 2147483647, %v227
        %v236 = vand.u32 2147483647, %v228
        %v237 = vand.u32 2147483647, %v229
        %v238 = vand.u32 2147483647, %v230
        %v239 = vand.u32 2147483647, %v231
        %v240 = vand.u32 2147483647, %v232
        %v241 = vand.u32 2147483647, %v233
        %vm242 = vcmask 261120
        %v243 = vsel %vm242, %v234, 0.0
        %v244 = vsel %vm242, %v235, 0.0
        %v245 = vadd.f32 %v243, %v244
        %v246 = vsel %vm242, %v236, 0.0
        %v247 = vadd.f32 %v245, %v246
        %v248 = vsel %vm242, %v237, 0.0
        %v249 = vadd.f32 %v247, %v248
        %v250 = vsel %vm242, %v238, 0.0
        %v251 = vadd.f32 %v249, %v250
        %v252 = vsel %vm242, %v239, 0.0
        %v253 = vadd.f32 %v251, %v252
        %v254 = vsel %vm242, %v240, 0.0
        %v255 = vadd.f32 %v253, %v254
        %v256 = vsel %vm242, %v241, 0.0
        %v257 = vadd.f32 %v255, %v256
        %v258 = vrot.slane %v257, 4
        %v259 = vadd.f32 %v257, %v258
        %v260 = vrot.slane %v259, 2
        %v261 = vadd.f32 %v259, %v260
        %v262 = vrot.slane %v261, 1
        %v263 = vadd.f32 %v261, %v262
        %vm264 = vcmask 253952
        %265 = vst.msk [vmem:[%s209] sm:$0x1] %vm264, %v263
        %v266 = vmul.f32 %v226, 2.0
        %v267 = vmul.f32 %v227, 2.0
        %v268 = vmul.f32 %v228, 2.0
        %v269 = vmul.f32 %v229, 2.0
        %v270 = vmul.f32 %v230, 2.0
        %v271 = vmul.f32 %v231, 2.0
        %v272 = vmul.f32 %v232, 2.0
        %v273 = vmul.f32 %v233, 2.0
        %vm282 = vcmask 1046528
        %v283 = vrot.slane %v266, 1
        %v284 = vrot.slane %v267, 1
        %v285 = vsel %vm282, %v283, %v284
        %v286 = vrot.slane %v268, 1
        %v287 = vsel %vm282, %v284, %v286
        %v288 = vrot.slane %v269, 1
        %v289 = vsel %vm282, %v286, %v288
        %v290 = vrot.slane %v270, 1
        %v291 = vrot.slane %v271, 1
        %v292 = vsel %vm282, %v290, %v291
        %v293 = vrot.slane %v272, 1
        %v294 = vsel %vm282, %v291, %v293
        %v295 = vrot.slane %v273, 1
        %v296 = vsel %vm282, %v293, %v295
        %v305 = vsub.f32 %v226, %v285
        %v306 = vsub.f32 %v227, %v287
        %v307 = vsub.f32 %v228, %v289
        %v308 = vsub.f32 %v229, %v288
        %v309 = vsub.f32 %v230, %v292
        %v310 = vsub.f32 %v231, %v294
        %v311 = vsub.f32 %v232, %v296
        %v312 = vsub.f32 %v233, %v295
        %vm321 = vcmask 1045504
        %v322 = vrot.slane %v226, 2
        %v323 = vrot.slane %v227, 2
        %v324 = vsel %vm321, %v322, %v323
        %v325 = vrot.slane %v228, 2
        %v326 = vsel %vm321, %v323, %v325
        %v327 = vrot.slane %v229, 2
        %v328 = vsel %vm321, %v325, %v327
        %v329 = vrot.slane %v230, 2
        %v330 = vrot.slane %v231, 2
        %v331 = vsel %vm321, %v329, %v330
        %v332 = vrot.slane %v232, 2
        %v333 = vsel %vm321, %v330, %v332
        %v334 = vrot.slane %v233, 2
        %v335 = vsel %vm321, %v332, %v334
        %v344 = vadd.f32 %v305, %v324
        %v345 = vadd.f32 %v306, %v326
        %v346 = vadd.f32 %v307, %v328
        %v347 = vadd.f32 %v308, %v327
        %v348 = vadd.f32 %v309, %v331
        %v349 = vadd.f32 %v310, %v333
        %v350 = vadd.f32 %v311, %v335
        %v351 = vadd.f32 %v312, %v334
        %v352 = vand.u32 2147483647, %v344
        %v353 = vand.u32 2147483647, %v345
        %v354 = vand.u32 2147483647, %v346
        %v355 = vand.u32 2147483647, %v347
        %v356 = vand.u32 2147483647, %v348
        %v357 = vand.u32 2147483647, %v349
        %v358 = vand.u32 2147483647, %v350
        %v359 = vand.u32 2147483647, %v351
        %v360 = vsel %vm242, %v352, 0.0
        %v361 = vsel %vm242, %v353, 0.0
        %v362 = vadd.f32 %v360, %v361
        %v363 = vsel %vm242, %v354, 0.0
        %v364 = vadd.f32 %v362, %v363
        %vm365 = vcmask 259072
        %v366 = vsel %vm365, %v355, 0.0
        %v367 = vadd.f32 %v364, %v366
        %v368 = vsel %vm242, %v356, 0.0
        %v369 = vadd.f32 %v367, %v368
        %v370 = vsel %vm242, %v357, 0.0
        %v371 = vadd.f32 %v369, %v370
        %v372 = vsel %vm242, %v358, 0.0
        %v373 = vadd.f32 %v371, %v372
        %v374 = vsel %vm365, %v359, 0.0
        %v375 = vadd.f32 %v373, %v374
        %v376 = vrot.slane %v375, 4
        %v377 = vadd.f32 %v375, %v376
        %v378 = vrot.slane %v377, 2
        %v379 = vadd.f32 %v377, %v378
        %v380 = vrot.slane %v379, 1
        %v381 = vadd.f32 %v379, %v380
        %382 = vst.msk [vmem:[%s209 + $0x1] sm:$0x1] %vm264, %v381
        %p383 = scmp.lt.s32.totalorder %s19, 1
        %s384 = scalar_select %p383, %s19, 1
        %s385 = smul.addr %s384, 2
        %s386 = scalar_lea.vmem %s2, %s385
        // Predicated region
        $region37: #{smoothnet_loss_pallas.1} parent=27 // pred_check
          %p387 = pneg %p89
        $region38: #{smoothnet_loss_pallas.1} parent=27 // pred_check_branch
          %389 = sbr.rel (%p387) target = $region40
        $region39: #{smoothnet_loss_pallas.1} parent=27 // pred_region
          _
        $region40: #{smoothnet_loss_pallas.1} parent=27 // pred_fallthru
          _
      $region28: #{smoothnet_loss_pallas.1} parent=5 // pred_fallthru
        _
      %p390 = scmp.le.s32.totalorder 2, %s14
      // Predicated region
      $region41: #{smoothnet_loss_pallas.1} parent=5 // pred_check
        %p391 = pneg %p390
      $region42: #{smoothnet_loss_pallas.1} parent=5 // pred_check_branch
        %393 = sbr.rel (%p391) target = $region44
      $region43: #{smoothnet_loss_pallas.1} parent=5 // pred_region
        %s394 = ssub.s32 %s14, 2
        // Predicated region
        $region45: #{smoothnet_loss_pallas.1} parent=43 // pred_check
          %p395 = pneg %p95
        $region46: #{smoothnet_loss_pallas.1} parent=43 // pred_check_branch
          %397 = sbr.rel (%p395) target = $region48
        $region47: #{smoothnet_loss_pallas.1} parent=43 // pred_region
          %p398 = scmp.lt.s32.totalorder %s20, 1
          %s399 = scalar_select %p398, %s20, 1
          %s400 = smul.addr %s399, 2
          %s401 = scalar_lea.vmem %s2, %s400
        $region48: #{smoothnet_loss_pallas.1} parent=43 // pred_fallthru
          _
      $region44: #{smoothnet_loss_pallas.1} parent=5 // pred_fallthru
        _
    $region6: #{smoothnet_loss_pallas.1} parent=1 // loop_footer
      %s18 = sadd.s32 1, %s14
    $region7: #{smoothnet_loss_pallas.1} parent=1 // loop_footer_branch
      %13 = sbr.rel target = $region3
    $region8: #{smoothnet_loss_pallas.1} parent=1 // loop_exit
      _
    %402 = vsyncpa [#allocation3], 1
    %s403 = scalar_lea.sflag [#allocation3], 1
    %404 = vsyncpa %s403, 1
    %405 = vsyncpa [#allocation5], 1
    %s406 = scalar_lea.sflag [#allocation5], 1
    %407 = vsyncpa %s406, 1

</llo_original>
